<compile_context>
chip_gen: v6e
topology: v6e:2x2x1
jax: 0.10.0
libtpu: 0.0.40
codegen_flags: <defaults>
</compile_context>

<pallas_src>
import math
import functools

import jax
import jax.numpy as jnp
from jax.experimental import pallas as pl
from jax.experimental.pallas import tpu as pltpu


# ----------------------------------------------------------------------------
# In-kernel helpers (all math in f32)
# ----------------------------------------------------------------------------
def _activation(x, act):
    if act == "gelu":
        # tanh approximation (review: route transcendentals to the otherwise-idle EUP
        # instead of an erf polynomial on the VALU). Differs from exact erf-GELU ~1e-3.
        c = math.sqrt(2.0 / math.pi)
        return 0.5 * x * (1.0 + jnp.tanh(c * (x + 0.044715 * x * x * x)))
    if act == "relu":
        return jnp.maximum(x, 0.0)
    if act == "swish":
        return x * jax.nn.sigmoid(x)
    if act == "tanh":
        return jnp.tanh(x)
    if act == "sigmoid":
        return jax.nn.sigmoid(x)
    raise ValueError(f"unsupported activation: {act}")


def _layer_norm(y, gamma, beta, eps):
    # Biased variance, like torch.nn.LayerNorm.
    mu = jnp.mean(y, axis=-1, keepdims=True)
    var = jnp.mean((y - mu) ** 2, axis=-1, keepdims=True)
    return (y - mu) * jax.lax.rsqrt(var + eps) * gamma + beta


# ----------------------------------------------------------------------------
# Stage 1: fused QKV projection over row blocks of M = B*S
# ----------------------------------------------------------------------------
def _qkv_proj_kernel(x_ref, w_ref, b_ref, o_ref):
    acc = jnp.dot(x_ref[...], w_ref[...], preferred_element_type=jnp.float32)
    o_ref[...] = (acc + b_ref[...]).astype(o_ref.dtype)


# ----------------------------------------------------------------------------
# Stage 2: batched multi-head attention, batch dim G = b_tile * n_heads
#   qkv_ref : (3, b_tile, n_heads, S, d)   bf16
#   mask_ref: (b_tile, 1, S)               f32 additive mask
#   o_ref   : (b_tile, n_heads, S, d)      bf16 context
# ----------------------------------------------------------------------------
def _attention_kernel(qkv_ref, mask_ref, o_ref, *, b_tile, n_heads, seq_len, head_dim):
    g = b_tile * n_heads
    q = qkv_ref[0].reshape(g, seq_len, head_dim)
    k = qkv_ref[1].reshape(g, seq_len, head_dim)
    v = qkv_ref[2].reshape(g, seq_len, head_dim)

    # One batched MXU matmul for all (batch, head) pairs.
    scores = jnp.einsum("gqd,gkd->gqk", q, k, preferred_element_type=jnp.float32)
    scores = scores * (1.0 / math.sqrt(head_dim))

    mask = mask_ref[...]                                  # (b_tile, 1, S)
    scores = (scores.reshape(b_tile, n_heads, seq_len, seq_len)
              + mask[:, None, :, :]).reshape(g, seq_len, seq_len)

    m = jnp.max(scores, axis=-1, keepdims=True)
    e = jnp.exp(scores - m)
    denom = jnp.sum(e, axis=-1, keepdims=True)
    probs = e * pl.reciprocal(denom, approx=True)
    # TODO(synk): attn_dropout omitted (identity at inference).

    ctx = jnp.einsum("gqk,gkd->gqd", probs.astype(v.dtype), v,
                     preferred_element_type=jnp.float32)
    o_ref[...] = ctx.reshape(b_tile, n_heads, seq_len, head_dim).astype(o_ref.dtype)


# ----------------------------------------------------------------------------
# Stage 3: attention dense + LN1 + FFN + LN2 over row blocks of M = B*S
# ----------------------------------------------------------------------------
def _output_ffn_kernel(ctx_ref, x_ref, wd_ref, w1_ref, b1_ref, w2_ref, vecs_ref,
                       o_ref, *, eps, hidden_act):
    xf = x_ref[...]                                       # (TM, H) f32 residual
    bd = vecs_ref[0:1]
    gamma1 = vecs_ref[1:2]
    beta1 = vecs_ref[2:3]
    b2 = vecs_ref[3:4]
    gamma2 = vecs_ref[4:5]
    beta2 = vecs_ref[5:6]

    attn_dense = jnp.dot(ctx_ref[...], wd_ref[...],
                         preferred_element_type=jnp.float32) + bd
    # TODO(synk): out_dropout omitted (identity at inference).
    attn_out = _layer_norm(attn_dense + xf, gamma1, beta1, eps)

    h1 = jnp.dot(attn_out.astype(w1_ref.dtype), w1_ref[...],
                 preferred_element_type=jnp.float32) + b1_ref[...]
    h1 = _activation(h1, hidden_act)
    h2 = jnp.dot(h1.astype(w2_ref.dtype), w2_ref[...],
                 preferred_element_type=jnp.float32) + b2
    # TODO(synk): FFN hidden dropout omitted (identity at inference).
    o_ref[...] = _layer_norm(h2 + attn_out, gamma2, beta2, eps).astype(o_ref.dtype)


# ----------------------------------------------------------------------------
# Tiling heuristics and VMEM budgeting
# ----------------------------------------------------------------------------
def _pick_row_block(m, cap=512, min_steps=4):
    """Largest multiple-of-8 divisor of m that is <= cap, preferring >= min_steps
    grid steps (v7x overlap); falls back to the full extent (always legal)."""
    if m % 8 != 0:
        return m
    best_any, best_steps = None, None
    for rb in range(8, min(m, cap) + 1, 8):
        if m % rb == 0:
            best_any = rb
            if m // rb >= min_steps:
                best_steps = rb
    return best_steps or best_any or m


def _pick_b_tile(batch, n_heads, seq, d, mm_size, vmem_budget=24 << 20):
    """Largest b_tile that divides batch, fits a per-step VMEM estimate, and keeps
    >= 4 grid steps when batch allows it."""
    min_steps = 4 if batch >= 4 else 1
    best = 1
    for bt in range(1, batch + 1):
        if batch % bt:
            continue
        est = (2 * 3 * bt * n_heads * seq * d * mm_size      # double-buffered qkv block
               + 3 * bt * n_heads * seq * seq * 4            # scores / exp / probs (f32)
               + 2 * bt * n_heads * seq * d * (4 + mm_size)  # ctx f32 + out block
               + 2 * bt * seq * 4)                           # mask
        if est <= vmem_budget and batch // bt >= min_steps:
            best = bt
    return best


def _vmem_limit(*nbytes):
    # Explicit scoped-VMEM limit (review: defaults 16/32 MiB are too small at
    # production H). Double-buffer everything + slack; keep head-room for v7x (64 MiB).
    need = 2 * sum(int(n) for n in nbytes) + (8 << 20)
    return int(min(max(need, 32 << 20), 100 << 20))


# ----------------------------------------------------------------------------
# Wrapper
# ----------------------------------------------------------------------------
def transformer_layer_d(x, attention_mask, params, *, n_heads, layer_norm_eps,
                        hidden_act="gelu", mm_dtype=jnp.bfloat16,
                        b_tile=None, row_block=None):
    """x: (B, S, H) f32.  attention_mask: (B, 1, 1, S) additive f32 mask.

    Weights in `params` are stored as (in, out) = W^T of the torch nn.Linear weights,
    biases as (1, out)."""
    B, S, H = x.shape
    assert H % n_heads == 0
    d = H // n_heads
    inner = params["w1"].shape[1]
    M = B * S
    mm_size = jnp.dtype(mm_dtype).itemsize

    # ---- pack / cast parameters (wrapper-side layout plumbing, done once) ----
    w_qkv = jnp.concatenate([params["wq"], params["wk"], params["wv"]], 1).astype(mm_dtype)
    b_qkv = jnp.concatenate([params["bq"], params["bk"], params["bv"]], 1).astype(jnp.float32)
    wd = params["wd"].astype(mm_dtype)
    w1 = params["w1"].astype(mm_dtype)
    w2 = params["w2"].astype(mm_dtype)
    b1 = params["b1"].astype(jnp.float32)
    vecs = jnp.concatenate([params["bd"], params["gamma1"], params["beta1"],
                            params["b2"], params["gamma2"], params["beta2"]],
                           0).astype(jnp.float32)          # (6, H)

    x2d_f32 = x.reshape(M, H).astype(jnp.float32)
    x2d_mm = x2d_f32.astype(mm_dtype)
    mask3 = attention_mask.reshape(B, 1, S).astype(jnp.float32)

    rb = row_block or _pick_row_block(M)
    if M % rb != 0:
        rb = M
    bt = b_tile or _pick_b_tile(B, n_heads, S, d, mm_size)
    assert B % bt == 0

    # -------------------------- Stage 1: QKV projection ----------------------
    qkv2d = pl.pallas_call(
        _qkv_proj_kernel,
        out_shape=jax.ShapeDtypeStruct((M, 3 * H), mm_dtype),
        grid=(M // rb,),
        in_specs=[
            pl.BlockSpec((rb, H), lambda i: (i, 0)),
            pl.BlockSpec((H, 3 * H), lambda i: (0, 0)),      # resident weight
            pl.BlockSpec((1, 3 * H), lambda i: (0, 0)),
        ],
        out_specs=pl.BlockSpec((rb, 3 * H), lambda i: (i, 0)),
        compiler_params=pltpu.CompilerParams(
            dimension_semantics=("parallel",),
            vmem_limit_bytes=_vmem_limit(rb * H * mm_size, H * 3 * H * mm_size,
                                         3 * H * 4, rb * 3 * H * mm_size)),
    )(x2d_mm, w_qkv, b_qkv)

    # transpose_for_scores as free reshape + XLA transpose (no in-kernel relayout)
    qkv5 = qkv2d.reshape(B, S, 3, n_heads, d).transpose(2, 0, 3, 1, 4)  # (3,B,nh,S,d)

    # -------------------------- Stage 2: batched attention -------------------
    ctx_hm = pl.pallas_call(
        functools.partial(_attention_kernel, b_tile=bt, n_heads=n_heads,
                          seq_len=S, head_dim=d),
        out_shape=jax.ShapeDtypeStruct((B, n_heads, S, d), mm_dtype),
        grid=(B // bt,),
        in_specs=[
            pl.BlockSpec((3, bt, n_heads, S, d), lambda g: (0, g, 0, 0, 0)),
            pl.BlockSpec((bt, 1, S), lambda g: (g, 0, 0)),
        ],
        out_specs=pl.BlockSpec((bt, n_heads, S, d), lambda g: (g, 0, 0, 0)),
        compiler_params=pltpu.CompilerParams(
            dimension_semantics=("parallel",),
            vmem_limit_bytes=_vmem_limit(3 * bt * n_heads * S * d * mm_size,
                                         bt * S * 4,
                                         bt * n_heads * S * d * mm_size,
                                         3 * bt * n_heads * S * S * 4)),
    )(qkv5, mask3)

    # heads back into the lane dimension (layout plumbing only)
    ctx2d = ctx_hm.transpose(0, 2, 1, 3).reshape(M, H)

    # -------------------------- Stage 3: out-proj + FFN ----------------------
    out2d = pl.pallas_call(
        functools.partial(_output_ffn_kernel, eps=layer_norm_eps, hidden_act=hidden_act),
        out_shape=jax.ShapeDtypeStruct((M, H), jnp.float32),
        grid=(M // rb,),
        in_specs=[
            pl.BlockSpec((rb, H), lambda i: (i, 0)),          # ctx (bf16)
            pl.BlockSpec((rb, H), lambda i: (i, 0)),          # x residual (f32)
            pl.BlockSpec((H, H), lambda i: (0, 0)),           # wd
            pl.BlockSpec((H, inner), lambda i: (0, 0)),       # w1
            pl.BlockSpec((1, inner), lambda i: (0, 0)),       # b1
            pl.BlockSpec((inner, H), lambda i: (0, 0)),       # w2
            pl.BlockSpec((6, H), lambda i: (0, 0)),           # packed bias/LN vectors
        ],
        out_specs=pl.BlockSpec((rb, H), lambda i: (i, 0)),
        compiler_params=pltpu.CompilerParams(
            dimension_semantics=("parallel",),
            vmem_limit_bytes=_vmem_limit(rb * H * mm_size, rb * H * 4,
                                         H * H * mm_size, H * inner * mm_size,
                                         inner * 4, inner * H * mm_size, 6 * H * 4,
                                         rb * H * 4, 2 * rb * inner * 4)),
    )(ctx2d, x2d_f32, wd, w1, b1, w2, vecs)

    return out2d.reshape(B, S, H)


# ----------------------------------------------------------------------------
# Plain-JAX reference (PyTorch forward in eval mode); mm_dtype / tanh_gelu let it
# mirror the kernel's precision choices for a tight check.
# ----------------------------------------------------------------------------
def _reference(x, attention_mask, params, *, n_heads, layer_norm_eps,
               hidden_act="gelu", mm_dtype=jnp.float32, tanh_gelu=False):
    B, S, H = x.shape
    d = H // n_heads
    f32 = jnp.float32

    def mm(a, w):
        return jnp.dot(a.astype(mm_dtype), w.astype(mm_dtype),
                       preferred_element_type=f32)

    def ln(y, gamma, beta):
        mu = y.mean(-1, keepdims=True)
        var = ((y - mu) ** 2).mean(-1, keepdims=True)
        return (y - mu) / jnp.sqrt(var + layer_norm_eps) * gamma[0] + beta[0]

    def act(h):
        if hidden_act == "gelu":
            if tanh_gelu:
                c = math.sqrt(2.0 / math.pi)
                return 0.5 * h * (1.0 + jnp.tanh(c * (h + 0.044715 * h ** 3)))
            return h * 0.5 * (1.0 + jax.scipy.special.erf(h / math.sqrt(2.0)))
        if hidden_act == "relu":
            return jax.nn.relu(h)
        if hidden_act == "swish":
            return h * jax.nn.sigmoid(h)
        if hidden_act == "tanh":
            return jnp.tanh(h)
        return jax.nn.sigmoid(h)

    x2 = x.reshape(B * S, H).astype(f32)

    def proj(w, b):
        return (mm(x2, w) + b).astype(mm_dtype)

    q = proj(params["wq"], params["bq"]).reshape(B, S, n_heads, d).transpose(0, 2, 1, 3)
    k = proj(params["wk"], params["bk"]).reshape(B, S, n_heads, d).transpose(0, 2, 1, 3)
    v = proj(params["wv"], params["bv"]).reshape(B, S, n_heads, d).transpose(0, 2, 1, 3)

    scores = jnp.einsum("bhqd,bhkd->bhqk", q, k,
                        preferred_element_type=f32) / math.sqrt(d)
    scores = scores + attention_mask.astype(f32)
    probs = jax.nn.softmax(scores, axis=-1).astype(mm_dtype)
    ctx = jnp.einsum("bhqk,bhkd->bhqd", probs, v, preferred_element_type=f32)
    ctx = ctx.transpose(0, 2, 1, 3).reshape(B * S, H).astype(mm_dtype)

    attn = ln(mm(ctx, params["wd"]) + params["bd"] + x2,
              params["gamma1"], params["beta1"])
    h1 = act(mm(attn, params["w1"]) + params["b1"])
    h2 = mm(h1, params["w2"]) + params["b2"]
    out = ln(h2 + attn, params["gamma2"], params["beta2"])
    return out.reshape(B, S, H)


# ----------------------------------------------------------------------------
if __name__ == "__main__":
    n_heads = 4
    hidden_size = 32
    intermediate_size = 64
    layer_norm_eps = 1e-12
    hidden_act = "gelu"
    B, S = 4, 8

    key = jax.random.PRNGKey(0)
    ks = jax.random.split(key, 16)
    scale_h = 1.0 / math.sqrt(hidden_size)
    scale_i = 1.0 / math.sqrt(intermediate_size)

    params = {
        "wq": jax.random.normal(ks[0], (hidden_size, hidden_size), jnp.float32) * scale_h,
        "bq": jax.random.normal(ks[1], (1, hidden_size), jnp.float32) * 0.01,
        "wk": jax.random.normal(ks[2], (hidden_size, hidden_size), jnp.float32) * scale_h,
        "bk": jax.random.normal(ks[3], (1, hidden_size), jnp.float32) * 0.01,
        "wv": jax.random.normal(ks[4], (hidden_size, hidden_size), jnp.float32) * scale_h,
        "bv": jax.random.normal(ks[5], (1, hidden_size), jnp.float32) * 0.01,
        "wd": jax.random.normal(ks[6], (hidden_size, hidden_size), jnp.float32) * scale_h,
        "bd": jax.random.normal(ks[7], (1, hidden_size), jnp.float32) * 0.01,
        "gamma1": jnp.ones((1, hidden_size), jnp.float32),
        "beta1": jnp.zeros((1, hidden_size), jnp.float32),
        "w1": jax.random.normal(ks[8], (hidden_size, intermediate_size), jnp.float32) * scale_h,
        "b1": jax.random.normal(ks[9], (1, intermediate_size), jnp.float32) * 0.01,
        "w2": jax.random.normal(ks[10], (intermediate_size, hidden_size), jnp.float32) * scale_i,
        "b2": jax.random.normal(ks[11], (1, hidden_size), jnp.float32) * 0.01,
        "gamma2": jnp.ones((1, hidden_size), jnp.float32),
        "beta2": jnp.zeros((1, hidden_size), jnp.float32),
    }

    x = jax.random.normal(ks[12], (B, S, hidden_size), jnp.float32)
    # Compact additive attention mask (B, 1, 1, S): 0 = keep, -10000 = masked.
    keep = jax.random.bernoulli(ks[13], 0.85, (B, 1, 1, S)).astype(jnp.float32)
    mask = (1.0 - keep) * -10000.0

    out = transformer_layer_d(x, mask, params,
                              n_heads=n_heads,
                              layer_norm_eps=layer_norm_eps,
                              hidden_act=hidden_act,
                              mm_dtype=jnp.bfloat16)
    out = jax.block_until_ready(out)

    # Reference mirroring the kernel's precision choices (bf16 matmul operands,
    # tanh-GELU).  Remaining deltas: approximate-reciprocal softmax + f32
    # accumulation-order differences, which can flip a bf16 ulp -> ~1e-2 budget.
    ref = _reference(x, mask, params,
                     n_heads=n_heads,
                     layer_norm_eps=layer_norm_eps,
                     hidden_act=hidden_act,
                     mm_dtype=jnp.bfloat16,
                     tanh_gelu=True)
    assert jnp.allclose(out, ref, atol=1e-2, rtol=1e-2), "mismatch vs reference"

    print("KERNEL_OK")
</pallas_src>

<mosaic_0001>
module attributes {stable_mosaic.version = 11 : i64} {
  func.func @_qkv_proj_kernel(%arg0: i32, %arg1: memref<8x32xbf16, #tpu.memory_space<vmem>>, %arg2: memref<32x96xbf16, #tpu.memory_space<vmem>>, %arg3: memref<1x96xf32, #tpu.memory_space<vmem>>, %arg4: memref<8x96xbf16, #tpu.memory_space<vmem>>) attributes {dimension_semantics = [#tpu.dimension_semantics<parallel>], iteration_bounds = array<i64: 4>, scalar_prefetch = 0 : i64, scratch_operands = 0 : i64, tpu.core_type = #tpu.core_type<tc>, window_params = [{transform_indices = @transform_0, window_bounds = array<i64: 8, 32>}, {pipeline_mode = #tpu.pipeline_mode<synchronous>, transform_indices = @transform_1, window_bounds = array<i64: 32, 96>}, {pipeline_mode = #tpu.pipeline_mode<synchronous>, transform_indices = @transform_2, window_bounds = array<i64: 1, 96>}, {transform_indices = @transform_3, window_bounds = array<i64: 8, 96>}]} {
    %c0 = arith.constant 0 : index
    %c0_0 = arith.constant 0 : index
    %0 = vector.load %arg1[%c0, %c0_0] : memref<8x32xbf16, #tpu.memory_space<vmem>>, vector<8x32xbf16>
    %c0_1 = arith.constant 0 : index
    %c0_2 = arith.constant 0 : index
    %1 = vector.load %arg2[%c0_1, %c0_2] : memref<32x96xbf16, #tpu.memory_space<vmem>>, vector<32x96xbf16>
    %cst = arith.constant dense<0.000000e+00> : vector<8x96xf32>
    %2 = tpu.matmul %0, %1, %cst {dimension_numbers = #tpu.dot_dimension_numbers<[1], [0], [0], [1], [0, 0, 1, 1], [], []>} : vector<8x32xbf16>, vector<32x96xbf16>, vector<8x96xf32> -> vector<8x96xf32>
    %c0_3 = arith.constant 0 : index
    %c0_4 = arith.constant 0 : index
    %3 = vector.load %arg3[%c0_3, %c0_4] : memref<1x96xf32, #tpu.memory_space<vmem>>, vector<1x96xf32>
    %4 = vector.broadcast %3 : vector<1x96xf32> to vector<8x96xf32>
    %5 = arith.addf %2, %4 : vector<8x96xf32>
    %6 = arith.truncf %5 : vector<8x96xf32> to vector<8x96xbf16>
    %c0_5 = arith.constant 0 : index
    %c0_6 = arith.constant 0 : index
    %7 = vector.load %arg4[%c0_5, %c0_6] : memref<8x96xbf16, #tpu.memory_space<vmem>>, vector<8x96xbf16>
    tpu.vector_store %arg4[%c0_5, %c0_6], %6 {strides = array<i32>} : memref<8x96xbf16, #tpu.memory_space<vmem>>, vector<8x96xbf16>,
    return
  }
  func.func @transform_0(%arg0: i32) -> (i32, i32) {
    %c0_i32 = arith.constant 0 : i32
    %c0_i32_0 = arith.constant 0 : i32
    return %arg0, %c0_i32 : i32, i32
  }
  func.func @transform_1(%arg0: i32) -> (i32, i32) {
    %c0_i32 = arith.constant 0 : i32
    %c0_i32_0 = arith.constant 0 : i32
    %c0_i32_1 = arith.constant 0 : i32
    return %c0_i32, %c0_i32_0 : i32, i32
  }
  func.func @transform_2(%arg0: i32) -> (i32, i32) {
    %c0_i32 = arith.constant 0 : i32
    %c0_i32_0 = arith.constant 0 : i32
    %c0_i32_1 = arith.constant 0 : i32
    return %c0_i32, %c0_i32_0 : i32, i32
  }
  func.func @transform_3(%arg0: i32) -> (i32, i32) {
    %c0_i32 = arith.constant 0 : i32
    %c0_i32_0 = arith.constant 0 : i32
    return %arg0, %c0_i32 : i32, i32
  }
}

</mosaic_0001>

<llo_original>
// kernel: tpu_custom_call.1
$region0: #{tpu_custom_call.1}
  #allocation0 [shape = 'u32[]', space=smem, size = 0x4, offset = 0x4, fixed_abs, tag = 'smem constant byte address 0x4 - core index']
  #allocation1 [shape = 'u32[144,128]{1,0:T(1,128)}', space=vmem, size = 0x12000, scoped, tag = 'internal scratch']
  %s0 = inlined_call_operand.hbm [shape: bf16[32,32], index: 0, kind: input, shape index: {}]
  %s1 = inlined_call_operand.hbm [shape: bf16[32,96], index: 1, kind: input, shape index: {}]
  %s2 = inlined_call_operand.vmem [shape: f32[1,96], index: 2, kind: input, shape index: {}]
  %s3 = inlined_call_operand.hbm [shape: bf16[32,96], index: 3, kind: output, shape index: {}]
  %s4 = sld [smem:[#allocation0]]
  $region53: #{tpu_custom_call.1} parent=0
    _
  %s6 = ssub.s32 1, %s4
  %s7 = scalar_select 0, %s6, %s4
  $region1: #{tpu_custom_call.1} parent=0
    #allocation2 [shape = 'u8[4096]{0}', space=vmem, size = 0x1000, scoped, tag = 'input window, operand 0']
    #allocation3 [shape = 's32[2]{0}', space=sflag, size = 0x8, scoped, tag = 'scoped memory for tpu_custom_call.1']
    #allocation4 [shape = 's32[2]{0}', space=sflag, size = 0x8, scoped, tag = 'scoped memory for tpu_custom_call.1']
    #allocation5 [shape = 'u8[8192]{0}', space=vmem, size = 0x2000, scoped, tag = 'input window, operand 1, single buffered']
    #allocation6 [shape = 's32[1]{0}', space=sflag, size = 0x4, scoped, tag = 'scoped memory for tpu_custom_call.1']
    #allocation7 [shape = 'u8[4096]{0}', space=vmem, size = 0x1000, scoped, tag = 'output window, operand 0']
    %8 = vsyncpa [#allocation3], 0
    %s9 = scalar_lea.sflag [#allocation3], 1
    %10 = vsyncpa %s9, 0
    %11 = vsyncpa [#allocation6], 0
    %12 = vsyncpa [#allocation4], 0
    %s13 = scalar_lea.sflag [#allocation4], 1
    %14 = vsyncpa %s13, 0
    loop: start=0, step=1, limit=6
    $region2: #{tpu_custom_call.1} parent=1 // loop_pre_header
      _
    $region3: #{tpu_custom_call.1} parent=1 // loop_header
      %s16 = sphi 0, %s20
      %p17 = scmp.ge.s32.totalorder %s16, 6
      %s26 = sphi 0, %s28
      %s29 = sphi 0, %s26
      %s30 = sphi 0, %s29
      %s46 = sphi 0, %s30
      %s50 = sphi 0, %s50
      %s52 = sphi 0, %s50
      %s53 = sphi 0, %s52
      %s67 = sphi 0, %s53
      %s71 = sphi 0, %s71
      %s73 = sphi 0, %s71
      %s74 = sphi 0, %s73
      %s88 = sphi 0, %s74
      %s94 = sphi 0, %s96
      %s97 = sphi 0, %s94
      %s98 = sphi 0, %s97
      %s114 = sphi 0, %s98
    $region4: #{tpu_custom_call.1} parent=1 // loop_header_branch
      %19 = sbr.rel (%p17) target = $region8
    $region5: #{tpu_custom_call.1} parent=1 // loop_body
      %s21 = ssub.s32 %s16, 1
      %s22 = ssub.s32 %s16, 2
      %s23 = sadd.s32 %s16, 1
      %s24 = ssub.s32 %s16, %s23
      %p25 = scmp.eq.s32.totalorder %s24, 0
      %s27 = sadd.s32 %s26, 1
      %s28 = scalar_select %p25, %s26, %s27
      %p31 = pneg %p25
      %p32 = scmp.eq.s32.totalorder %s16, 3
      %p33 = por %p31, %p32
      %p34 = scmp.ne.s32.totalorder %s26, %s29
      %p35 = scmp.eq.s32.totalorder %s16, 0
      %p36 = por %p34, %p35
      %p37 = scmp.ne.s32.totalorder %s26, %s29
      %p38 = scmp.eq.s32.totalorder %s21, 3
      %p39 = por %p37, %p38
      %p40 = scmp.ne.s32.totalorder %s29, %s30
      %p41 = scmp.eq.s32.totalorder %s21, 0
      %p42 = por %p40, %p41
      %p43 = scmp.ne.s32.totalorder %s29, %s30
      %p44 = scmp.eq.s32.totalorder %s22, 3
      %p45 = por %p43, %p44
      %p47 = scmp.ne.s32.totalorder %s30, %s46
      %p48 = scmp.eq.s32.totalorder %s22, 0
      %p49 = por %p47, %p48
      %s51 = sadd.s32 %s50, 1
      %p54 = scmp.eq.s32.totalorder %s16, 3
      %p55 = scmp.ne.s32.totalorder %s50, %s52
      %p56 = scmp.eq.s32.totalorder %s16, 0
      %p57 = por %p55, %p56
      %p58 = scmp.ne.s32.totalorder %s50, %s52
      %p59 = scmp.eq.s32.totalorder %s21, 3
      %p60 = por %p58, %p59
      %p61 = scmp.ne.s32.totalorder %s52, %s53
      %p62 = scmp.eq.s32.totalorder %s21, 0
      %p63 = por %p61, %p62
      %p64 = scmp.ne.s32.totalorder %s52, %s53
      %p65 = scmp.eq.s32.totalorder %s22, 3
      %p66 = por %p64, %p65
      %p68 = scmp.ne.s32.totalorder %s53, %s67
      %p69 = scmp.eq.s32.totalorder %s22, 0
      %p70 = por %p68, %p69
      %s72 = sadd.s32 %s71, 1
      %p75 = scmp.eq.s32.totalorder %s16, 3
      %p76 = scmp.ne.s32.totalorder %s71, %s73
      %p77 = scmp.eq.s32.totalorder %s16, 0
      %p78 = por %p76, %p77
      %p79 = scmp.ne.s32.totalorder %s71, %s73
      %p80 = scmp.eq.s32.totalorder %s21, 3
      %p81 = por %p79, %p80
      %p82 = scmp.ne.s32.totalorder %s73, %s74
      %p83 = scmp.eq.s32.totalorder %s21, 0
      %p84 = por %p82, %p83
      %p85 = scmp.ne.s32.totalorder %s73, %s74
      %p86 = scmp.eq.s32.totalorder %s22, 3
      %p87 = por %p85, %p86
      %p89 = scmp.ne.s32.totalorder %s74, %s88
      %p90 = scmp.eq.s32.totalorder %s22, 0
      %p91 = por %p89, %p90
      %s92 = ssub.s32 %s16, %s23
      %p93 = scmp.eq.s32.totalorder %s92, 0
      %s95 = sadd.s32 %s94, 1
      %s96 = scalar_select %p93, %s94, %s95
      %p99 = pneg %p93
      %p100 = scmp.eq.s32.totalorder %s16, 3
      %p101 = por %p99, %p100
      %p102 = scmp.ne.s32.totalorder %s94, %s97
      %p103 = scmp.eq.s32.totalorder %s16, 0
      %p104 = por %p102, %p103
      %p105 = scmp.ne.s32.totalorder %s94, %s97
      %p106 = scmp.eq.s32.totalorder %s21, 3
      %p107 = por %p105, %p106
      %p108 = scmp.ne.s32.totalorder %s97, %s98
      %p109 = scmp.eq.s32.totalorder %s21, 0
      %p110 = por %p108, %p109
      %p111 = scmp.ne.s32.totalorder %s97, %s98
      %p112 = scmp.eq.s32.totalorder %s22, 3
      %p113 = por %p111, %p112
      %p115 = scmp.ne.s32.totalorder %s98, %s114
      %p116 = scmp.eq.s32.totalorder %s22, 0
      %p117 = por %p115, %p116
      %p118 = scmp.le.s32.totalorder 1, %s16
      %p119 = scmp.lt.s32.totalorder %s16, 5
      %p120 = pnand %p118, %p119
      %p121 = pneg %p120
      // Predicated region
      $region9: #{tpu_custom_call.1} parent=5 // pred_check
        _
      $region10: #{tpu_custom_call.1} parent=5 // pred_check_branch
        %123 = sbr.rel (%p120) target = $region12
      $region11: #{tpu_custom_call.1} parent=5 // pred_region
        %s124 = ssub.s32 %s16, 1
        // Predicated region
        $region13: #{tpu_custom_call.1} parent=11 // pred_check
          %p125 = pneg %p63
        $region14: #{tpu_custom_call.1} parent=11 // pred_check_branch
          %127 = sbr.rel (%p125) target = $region16
        $region15: #{tpu_custom_call.1} parent=11 // pred_region
          %s129 = ssub.s32 256, 256
          %130 = vsyncadd [#allocation6], %s129
          %s131 = sshll.u32 [#allocation5], 4
          %s132 = int_to_ptr.vmem [resolvable:$true] %s131
          %137 = dma.hbm_to_vmem [thread:$0]  %s1, 256, %s132, [#allocation6], 64, 64, 4
        $region16: #{tpu_custom_call.1} parent=11 // pred_fallthru
          _
        // Predicated region
        $region17: #{tpu_custom_call.1} parent=11 // pred_check
          %p138 = pneg %p84
        $region18: #{tpu_custom_call.1} parent=11 // pred_check_branch
          %140 = sbr.rel (%p138) target = $region20
        $region19: #{tpu_custom_call.1} parent=11 // pred_region
          _
        $region20: #{tpu_custom_call.1} parent=11 // pred_fallthru
          _
      $region12: #{tpu_custom_call.1} parent=5 // pred_fallthru
        _
      %p141 = scmp.lt.s32.totalorder %s16, 4
      // Predicated region
      $region21: #{tpu_custom_call.1} parent=5 // pred_check
        %p142 = pneg %p141
      $region22: #{tpu_custom_call.1} parent=5 // pred_check_branch
        %144 = sbr.rel (%p142) target = $region24
      $region23: #{tpu_custom_call.1} parent=5 // pred_region
        // Predicated region
        $region25: #{tpu_custom_call.1} parent=23 // pred_check
          %p145 = pneg %p36
        $region26: #{tpu_custom_call.1} parent=23 // pred_check_branch
          %147 = sbr.rel (%p145) target = $region28
        $region27: #{tpu_custom_call.1} parent=23 // pred_region
          %s148 = sand.u32 %s26, 1
          %s149 = scalar_lea.sflag [#allocation3], %s148
          %s150 = sand.u32 %s26, 1
          %s151 = smul.addr %s150, 4
          %s152 = scalar_lea.vmem [#allocation2], %s151
          %s154 = ssub.s32 64, 64
          %155 = vsyncadd %s149, %s154
          %s156 = smul.addr %s16, 64
          %s157 = scalar_lea.hbm %s0, %s156
          %s159 = sshll.u32 %s152, 4
          %s160 = int_to_ptr.vmem [resolvable:$true] %s159
          %162 = dma.hbm_to_vmem [thread:$0]  %s157, 64, %s160, %s149
        $region28: #{tpu_custom_call.1} parent=23 // pred_fallthru
          _
      $region24: #{tpu_custom_call.1} parent=5 // pred_fallthru
        _
      %p163 = scmp.le.s32.totalorder 1, %s16
      %p164 = scmp.lt.s32.totalorder %s16, 5
      %p165 = pnand %p163, %p164
      %p166 = pneg %p165
      // Predicated region
      $region29: #{tpu_custom_call.1} parent=5 // pred_check
        _
      $region30: #{tpu_custom_call.1} parent=5 // pred_check_branch
        %168 = sbr.rel (%p165) target = $region32
      $region31: #{tpu_custom_call.1} parent=5 // pred_region
        %s169 = ssub.s32 %s16, 1
        %s170 = sand.u32 %s29, 1
        %s171 = scalar_lea.sflag [#allocation3], %s170
        %s172 = sand.u32 %s29, 1
        %s173 = smul.addr %s172, 4
        %s174 = scalar_lea.vmem [#allocation2], %s173
        // Predicated region
        $region33: #{tpu_custom_call.1} parent=31 // pred_check
          %p175 = pneg %p42
        $region34: #{tpu_custom_call.1} parent=31 // pred_check_branch
          %177 = sbr.rel (%p175) target = $region36
        $region35: #{tpu_custom_call.1} parent=31 // pred_region
          %178 = dma.done %s171, 64
        $region36: #{tpu_custom_call.1} parent=31 // pred_fallthru
          _
        // Predicated region
        $region37: #{tpu_custom_call.1} parent=31 // pred_check
          %p179 = pneg %p63
        $region38: #{tpu_custom_call.1} parent=31 // pred_check_branch
          %181 = sbr.rel (%p179) target = $region40
        $region39: #{tpu_custom_call.1} parent=31 // pred_region
          %182 = dma.done [#allocation6], 256
        $region40: #{tpu_custom_call.1} parent=31 // pred_fallthru
          _
        %s183 = sand.u32 %s29, 1
        %s184 = scalar_lea.sflag [#allocation3], %s183
        %s185 = sand.u32 %s29, 1
        %s186 = smul.addr %s185, 4
        %s187 = scalar_lea.vmem [#allocation2], %s186
        %p188 = pneg %p42
        %p189 = pneg %p39
        %p190 = pneg %p63
        %p191 = pneg %p60
        %p192 = pneg %p84
        %p193 = pneg %p81
        %p194 = pneg %p110
        %p195 = pneg %p107
        %s196 = sand.u32 %s97, 1
        %s197 = scalar_lea.sflag [#allocation4], %s196
        %s198 = sand.u32 %s97, 1
        %s199 = smul.addr %s198, 4
        %s200 = scalar_lea.vmem [#allocation7], %s199
        %v202 = vld [vmem:[%s174] sm:$0xf]
        %v203 = vld [vmem:[#allocation5] sm:$0xf]
        %v204 = vld [vmem:[#allocation5 + $0x4] sm:$0xf]
        %v205 = vld [vmem:[#allocation5 + $0x8] sm:$0xf]
        %v206 = vld [vmem:[#allocation5 + $0xc] sm:$0xf]
        %v207 = vld [vmem:[%s2] sm:$0x1]
        %v209 = vlaneseq
        %v210 = vshrl.u32 %v209, 7
        %v211 = vsub.s32 0, %v210
        %v212 = vrot.slane %v207, %v211
        %v218 = vunpack.c.l.b16 %v203
        %v219 = vunpack.c.l.b16 %v204
        %v220 = vunpack.c.l.b16 %v205
        %v221 = vunpack.c.l.b16 %v206
        %v222 = vpack.c.b16 %v219, %v218
        %v223 = vpack.c.b16 %v221, %v220
        %vm226 = vcmask 261120
        %v228 = vsel %vm226, %v202, 0
        %230 = vmatprep.subr.bf16.mxu0 0
        %231 = vmatpush1.bf16.msra.mxu0 0
        %232 = vmatprep.subr.bf16.mxu0 0
        %233 = vmatpush1.bf16.msra.mxu0 0
        %234 = vmatprep.subr.bf16.mxu0 0
        %235 = vmatpush1.bf16.msra.mxu0 0
        %236 = vmatprep.subr.bf16.mxu0 0
        %237 = vmatpush1.bf16.msra.mxu0 0
        %238 = vmatprep.subr.bf16.mxu0 0
        %239 = vmatpush1.bf16.msra.mxu0 0
        %240 = vmatprep.subr.bf16.mxu0 0
        %241 = vmatpush1.bf16.msra.mxu0 0
        %242 = vmatprep.subr.bf16.mxu0 0
        %243 = vmatpush1.bf16.msra.mxu0 %v223
        %244 = vmatprep.subr.bf16.mxu0 0
        %245 = vmatpush1.bf16.msra.mxu0 %v222
        %246 = vmatprep.subr.bf16.mxu0 0
        %247 = vmatpush2.bf16.msra.mxu0 0
        %248 = vmatprep.subr.bf16.mxu0 0
        %249 = vmatpush2.bf16.msra.mxu0 0
        %250 = vmatprep.subr.bf16.mxu0 0
        %251 = vmatpush2.bf16.msra.mxu0 0
        %252 = vmatprep.subr.bf16.mxu0 0
        %253 = vmatpush2.bf16.msra.mxu0 0
        %254 = vmatprep.subr.bf16.mxu0 0
        %255 = vmatpush2.bf16.msra.mxu0 0
        %256 = vmatprep.subr.bf16.mxu0 0
        %257 = vmatpush2.bf16.msra.mxu0 0
        %258 = vmatprep.subr.bf16.mxu0 0
        %259 = vmatpush2.bf16.msra.mxu0 0
        %260 = vmatprep.subr.bf16.mxu0 0
        %261 = vmatpush2.bf16.msra.mxu0 0
        %262 = vmatprep.mubr.bf16.mxu0 0
        %263 = vmatmul.mubr.bf16.gmra.mxu0 %v228
        %v264 = vpop.f32.mrf.mxu0
        %v265 = vadd.f32 %v212, %v264
        %v266 = vpop.f32.mrf.mxu0
        %v267 = vpop.f32.mrf.mxu0
        %v268 = vpop.f32.mrf.mxu0
        %269 = vdwg.mxu0
        %v270 = vpack.c.bf16 %v265, %v265
        %vm271 = vcmask 781312
        %272 = vst.msk [vmem:[%s200] sm:$0xf] %vm271, %v270
        %s273 = sand.u32 %s97, 1
        %s274 = scalar_lea.sflag [#allocation4], %s273
        %s275 = sand.u32 %s97, 1
        %s276 = smul.addr %s275, 4
        %s277 = scalar_lea.vmem [#allocation7], %s276
        // Predicated region
        $region41: #{tpu_custom_call.1} parent=31 // pred_check
          %p278 = pneg %p107
        $region42: #{tpu_custom_call.1} parent=31 // pred_check_branch
          %280 = sbr.rel (%p278) target = $region44
        $region43: #{tpu_custom_call.1} parent=31 // pred_region
          %s282 = ssub.s32 64, 64
          %283 = vsyncadd %s274, %s282
          %s284 = smul.addr %s21, 64
          %s285 = scalar_lea.hbm %s3, %s284
          %s287 = sshll.u32 %s277, 4
          %s288 = int_to_ptr.vmem [resolvable:$true] %s287
          %290 = dma.vmem_to_hbm [thread:$0]  %s288, 64, %s285, %s274
        $region44: #{tpu_custom_call.1} parent=31 // pred_fallthru
          _
      $region32: #{tpu_custom_call.1} parent=5 // pred_fallthru
        _
      %p291 = scmp.le.s32.totalorder 2, %s16
      // Predicated region
      $region45: #{tpu_custom_call.1} parent=5 // pred_check
        %p292 = pneg %p291
      $region46: #{tpu_custom_call.1} parent=5 // pred_check_branch
        %294 = sbr.rel (%p292) target = $region48
      $region47: #{tpu_custom_call.1} parent=5 // pred_region
        %s295 = ssub.s32 %s16, 2
        // Predicated region
        $region49: #{tpu_custom_call.1} parent=47 // pred_check
          %p296 = pneg %p113
        $region50: #{tpu_custom_call.1} parent=47 // pred_check_branch
          %298 = sbr.rel (%p296) target = $region52
        $region51: #{tpu_custom_call.1} parent=47 // pred_region
          %s299 = sand.u32 %s98, 1
          %s300 = scalar_lea.sflag [#allocation4], %s299
          %s301 = sand.u32 %s98, 1
          %s302 = smul.addr %s301, 4
          %s303 = scalar_lea.vmem [#allocation7], %s302
          %304 = dma.done %s300, 64
        $region52: #{tpu_custom_call.1} parent=47 // pred_fallthru
          _
      $region48: #{tpu_custom_call.1} parent=5 // pred_fallthru
        _
    $region6: #{tpu_custom_call.1} parent=1 // loop_footer
      %s20 = sadd.s32 1, %s16
    $region7: #{tpu_custom_call.1} parent=1 // loop_footer_branch
      %15 = sbr.rel target = $region3
    $region8: #{tpu_custom_call.1} parent=1 // loop_exit
      _
    %305 = vsyncpa [#allocation3], 1
    %s306 = scalar_lea.sflag [#allocation3], 1
    %307 = vsyncpa %s306, 1
    %308 = vsyncpa [#allocation6], 1
    %309 = vsyncpa [#allocation4], 1
    %s310 = scalar_lea.sflag [#allocation4], 1
    %311 = vsyncpa %s310, 1

</llo_original>
